<compile_context>
chip_gen: v7x
topology: tpu7x:2x2x1
jax: 0.10.0
libtpu: 0.0.40
codegen_flags: <defaults>
</compile_context>

<pallas_src>
import functools

import jax
import jax.numpy as jnp
from jax.experimental import pallas as pl
from jax.experimental.pallas import tpu as pltpu


def _round_up(x, m):
    return ((x + m - 1) // m) * m


# ---------------------------------------------------------------------------
# Fused MLP kernel: x -> L0 -> ReLU -> ... -> L_{n-1} [-> sigmoid]
# One grid step = one (tm, F) row tile; processed in <=256-row sub-chunks.
# ---------------------------------------------------------------------------
def _fused_mlp_kernel(x_ref, *refs, num_layers, sigmoid_output, chunk, num_chunks):
    o_ref = refs[-1]
    wb = refs[:-1]                       # (w0, b0, w1, b1, ...) VMEM-resident

    def do_rows(r0):
        h = x_ref[pl.ds(r0, chunk), :]                      # compute_dtype (bf16/f32)
        for i in range(num_layers):
            w = wb[2 * i][...]                               # (K_pad, N_pad) compute_dtype
            b = wb[2 * i + 1][...].astype(jnp.float32)       # (1, N_pad) f32
            y = jnp.dot(h.astype(w.dtype), w,
                        preferred_element_type=jnp.float32) + b
            if i < num_layers - 1:
                h = jnp.maximum(y, 0.0)                      # f32 VPU (v5e-safe)
            elif sigmoid_output:
                # sigmoid = 1/(1+exp(-y)); exp + reciprocal live on the EUP slot
                h = pl.reciprocal(1.0 + jnp.exp(-y), approx=True)
            else:
                h = y
        o_ref[pl.ds(r0, chunk), :] = h.astype(o_ref.dtype)

    if num_chunks == 1:
        do_rows(0)
    else:
        @pl.loop(0, num_chunks)
        def _(c):
            do_rows(pl.multiple_of(c * chunk, chunk))


# ---------------------------------------------------------------------------
# Host-side helpers
# ---------------------------------------------------------------------------
def mlp_dims(params):
    """True (unpadded) feature-dim chain: (in, hid, ..., out)."""
    return tuple([params[0][0].shape[0]] + [w.shape[1] for (w, _) in params])


def pad_mlp_params(params, compute_dtype=jnp.bfloat16):
    """Zero-pad weights/biases to lane-dense (x128) dims; weights cast to compute_dtype.

    Call ONCE and reuse (hoisted out of the per-call path — the padding ops would
    otherwise sit on the latency critical path of every small-M call)."""
    dims = mlp_dims(params)
    dims_pad = [_round_up(d, 128) for d in dims]
    wb = []
    for i, (w, b) in enumerate(params):
        kin, kout = w.shape
        kin_p, kout_p = dims_pad[i], dims_pad[i + 1]
        w_p = jnp.zeros((kin_p, kout_p), compute_dtype).at[:kin, :kout].set(
            w.astype(compute_dtype))
        b_p = jnp.zeros((1, kout_p), jnp.float32).at[:, :kout].set(
            b.astype(jnp.float32))
        wb += [w_p, b_p]
    return tuple(wb)


def _vmem_caps():
    """(tile budget, vmem_limit cap) derived from this chip's VMEM capacity."""
    try:
        cap = int(pltpu.get_tpu_info().vmem_capacity_bytes)
    except Exception:
        cap = 64 * 1024 * 1024                       # conservative: v7x per-TC VMEM
    if cap <= 64 * 1024 * 1024:                      # v7x-class: leave real headroom
        return 36 * 1024 * 1024, 48 * 1024 * 1024
    return 80 * 1024 * 1024, 100 * 1024 * 1024       # v5e / v6e: 128 MiB physical


# ---------------------------------------------------------------------------
# Wrapper: padding, tiling, pallas_call
# ---------------------------------------------------------------------------
def mlp_pallas(x, wb, dims, *, sigmoid_output=False, max_tile_m=1024, out_dtype=None):
    """x: (..., input_dim). wb: padded (w0,b0,...) from pad_mlp_params. dims: true dims."""
    num_layers = len(wb) // 2
    assert len(dims) == num_layers + 1
    compute_dtype = wb[0].dtype
    lead = x.shape[:-1]
    in_dim = x.shape[-1]
    assert in_dim == dims[0], (in_dim, dims)
    M = 1
    for d in lead:
        M *= d
    out_dim = dims[-1]
    dims_pad = [wb[0].shape[0]] + [wb[2 * i].shape[1] for i in range(num_layers)]
    in_pad, out_pad = dims_pad[0], dims_pad[-1]
    if out_dtype is None:
        out_dtype = x.dtype

    x_item = jnp.dtype(compute_dtype).itemsize
    out_item = jnp.dtype(out_dtype).itemsize
    wbytes = sum(int(a.size) * a.dtype.itemsize for a in wb)
    vmem_budget, vmem_cap = _vmem_caps()

    def tile_bytes(tm):
        c = min(tm, 256)
        io = 2 * tm * (in_pad * x_item + out_pad * out_item)   # double-buffered x/out tiles
        act = 2 * 4 * c * max(dims_pad)                        # live f32 h & y for one chunk
        return io + act + 2 * wbytes                           # weights are double-buffered too

    # ---- pick the M tile ----------------------------------------------------
    M_pad8 = _round_up(max(M, 1), 8)
    tm = _round_up(min(max_tile_m, M_pad8), 8)
    # megacore: keep >=2 (>=4 for big M) row tiles so both v7x TCs get work
    if M_pad8 >= 1024:
        tm = min(tm, _round_up(-(-M_pad8 // 4), 8))
    elif M_pad8 >= 256:
        tm = min(tm, _round_up(-(-M_pad8 // 2), 8))
    while tm > 8 and tile_bytes(tm) > vmem_budget:
        tm = _round_up(max(tm // 2, 8), 8)
    if tm > 256:
        tm = max(256, (tm // 256) * 256)      # so the in-kernel chunk loop divides evenly
    chunk = min(tm, 256)
    num_chunks = tm // chunk
    M_pad = _round_up(M, tm)
    grid = (M_pad // tm,)

    # ---- pad x (rows -> tile multiple, cols -> lane-dense) in compute_dtype --
    xf = x.reshape(M, in_dim)
    x_p = jnp.zeros((M_pad, in_pad), compute_dtype).at[:M, :in_dim].set(
        xf.astype(compute_dtype))

    in_specs = [pl.BlockSpec((tm, in_pad), lambda i: (i, 0))]
    for li in range(num_layers):
        kin_p, kout_p = dims_pad[li], dims_pad[li + 1]
        in_specs.append(pl.BlockSpec((kin_p, kout_p), lambda i: (0, 0)))   # resident W
        in_specs.append(pl.BlockSpec((1, kout_p), lambda i: (0, 0)))       # resident b
    out_spec = pl.BlockSpec((tm, out_pad), lambda i: (i, 0))

    flops = 0
    prev = dims[0]
    for d in dims[1:]:
        flops += 2 * M * prev * d
        prev = d
    cost = pl.CostEstimate(
        flops=flops,
        transcendentals=(M * out_dim) if sigmoid_output else 0,
        bytes_accessed=int(x_p.size) * x_item + wbytes + M_pad * out_pad * out_item,
    )

    vmem_limit = int(min(max(tile_bytes(tm) + 2 * 1024 * 1024, 8 * 1024 * 1024),
                         vmem_cap))

    kernel = functools.partial(
        _fused_mlp_kernel, num_layers=num_layers, sigmoid_output=sigmoid_output,
        chunk=chunk, num_chunks=num_chunks)

    out_p = pl.pallas_call(
        kernel,
        out_shape=jax.ShapeDtypeStruct((M_pad, out_pad), out_dtype),
        grid=grid,
        in_specs=in_specs,
        out_specs=out_spec,
        compiler_params=pltpu.CompilerParams(
            dimension_semantics=("parallel",),
            vmem_limit_bytes=vmem_limit),
        cost_estimate=cost,
    )(x_p, *wb)

    return out_p[:M, :out_dim].reshape(*lead, out_dim)


def mlp_apply(params, x, *, sigmoid_output=False, compute_dtype=jnp.bfloat16, **kw):
    """One-shot convenience (pads per call; prefer pad_mlp_params + mlp_pallas)."""
    wb = pad_mlp_params(params, compute_dtype)
    return mlp_pallas(x, wb, mlp_dims(params), sigmoid_output=sigmoid_output, **kw)


# ---------------------------------------------------------------------------
# Parameter init mirroring nn.Linear shapes (weights stored as (in, out))
# ---------------------------------------------------------------------------
def init_mlp_params(key, input_dim, hidden_dim, output_dim, num_layers):
    h = [hidden_dim] * (num_layers - 1)
    dims_in = [input_dim] + h
    dims_out = h + [output_dim]
    params = []
    for n_in, n_out in zip(dims_in, dims_out):
        key, kw, kb = jax.random.split(key, 3)
        bound = 1.0 / jnp.sqrt(jnp.float32(n_in))
        w = jax.random.uniform(kw, (n_in, n_out), jnp.float32, -bound, bound)
        b = jax.random.uniform(kb, (n_out,), jnp.float32, -bound, bound)
        params.append((w, b))
    return params


def mlp_reference(params, x, sigmoid_output=False, compute_dtype=jnp.float32):
    """Pure-JAX reference; compute_dtype mirrors the kernel's MXU operand dtype."""
    h = x.astype(jnp.float32)
    n = len(params)
    for i, (w, b) in enumerate(params):
        y = jnp.dot(h.astype(compute_dtype), w.astype(compute_dtype),
                    preferred_element_type=jnp.float32) + b.astype(jnp.float32)
        h = jnp.maximum(y, 0.0) if i < n - 1 else y
    if sigmoid_output:
        h = jax.nn.sigmoid(h)
    return h


if __name__ == "__main__":
    # Small shapes consistent with the SAM mask-decoder MLP usage.
    batch, seq = 2, 8
    input_dim, hidden_dim, output_dim, num_layers = 32, 64, 16, 3

    key = jax.random.PRNGKey(0)
    key, kx = jax.random.split(key)
    x = jax.random.normal(kx, (batch, seq, input_dim), jnp.float32)
    params = init_mlp_params(key, input_dim, hidden_dim, output_dim, num_layers)
    dims = mlp_dims(params)

    # --- default bf16-MXU path; weight padding hoisted out of the jitted call ---
    wb_bf16 = pad_mlp_params(params, jnp.bfloat16)          # once, reused below
    fwd = jax.jit(lambda wb, v: mlp_pallas(v, wb, dims, sigmoid_output=False))
    out = jax.block_until_ready(fwd(wb_bf16, x))
    ref_bf16 = mlp_reference(params, x, compute_dtype=jnp.bfloat16)
    assert out.shape == (batch, seq, output_dim), out.shape
    assert jnp.allclose(out, ref_bf16, atol=2e-2, rtol=2e-2), "bf16 mismatch"

    # --- sigmoid output path (approx EUP reciprocal -> slightly looser tol) ---
    fwd_sig = jax.jit(lambda wb, v: mlp_pallas(v, wb, dims, sigmoid_output=True))
    out_s = jax.block_until_ready(fwd_sig(wb_bf16, x))
    ref_s = mlp_reference(params, x, sigmoid_output=True, compute_dtype=jnp.bfloat16)
    assert jnp.allclose(out_s, ref_s, atol=1e-2, rtol=1e-2), "sigmoid mismatch"

    # --- exactness check: f32 compute path, tight tolerance ---
    wb_f32 = pad_mlp_params(params, jnp.float32)
    out32 = jax.block_until_ready(fwd(wb_f32, x))
    ref32 = mlp_reference(params, x)
    assert jnp.allclose(out32, ref32, atol=1e-5, rtol=1e-5), "f32 mismatch"

    # --- non-multiple-of-8 leading dims: exercises row padding machinery ---
    x2 = jax.random.normal(jax.random.PRNGKey(1), (3, 5, input_dim), jnp.float32)
    out2 = jax.block_until_ready(fwd(wb_bf16, x2))
    ref2 = mlp_reference(params, x2, compute_dtype=jnp.bfloat16)
    assert out2.shape == (3, 5, output_dim), out2.shape
    assert jnp.allclose(out2, ref2, atol=2e-2, rtol=2e-2), "padded-M mismatch"

    # --- larger M: exercises multi-tile grid + in-kernel 256-row chunk loop ---
    x3 = jax.random.normal(jax.random.PRNGKey(2), (16, 128, input_dim), jnp.float32)
    out3 = jax.block_until_ready(fwd(wb_bf16, x3))
    ref3 = mlp_reference(params, x3, compute_dtype=jnp.bfloat16)
    assert out3.shape == (16, 128, output_dim), out3.shape
    assert jnp.allclose(out3, ref3, atol=2e-2, rtol=2e-2), "large-M mismatch"

    print("KERNEL_OK")
</pallas_src>

<mosaic_0001>
module attributes {stable_mosaic.version = 11 : i64} {
  func.func @_fused_mlp_kernel(%arg0: i32, %arg1: memref<16x128xbf16, #tpu.memory_space<vmem>>, %arg2: memref<128x128xbf16, #tpu.memory_space<vmem>>, %arg3: memref<1x128xf32, #tpu.memory_space<vmem>>, %arg4: memref<128x128xbf16, #tpu.memory_space<vmem>>, %arg5: memref<1x128xf32, #tpu.memory_space<vmem>>, %arg6: memref<128x128xbf16, #tpu.memory_space<vmem>>, %arg7: memref<1x128xf32, #tpu.memory_space<vmem>>, %arg8: memref<16x128xf32, #tpu.memory_space<vmem>>) attributes {dimension_semantics = [#tpu.dimension_semantics<parallel>], iteration_bounds = array<i64: 1>, scalar_prefetch = 0 : i64, scratch_operands = 0 : i64, tpu.core_type = #tpu.core_type<tc>, window_params = [{transform_indices = @transform_0, window_bounds = array<i64: 16, 128>}, {pipeline_mode = #tpu.pipeline_mode<synchronous>, transform_indices = @transform_1, window_bounds = array<i64: 128, 128>}, {pipeline_mode = #tpu.pipeline_mode<synchronous>, transform_indices = @transform_2, window_bounds = array<i64: 1, 128>}, {pipeline_mode = #tpu.pipeline_mode<synchronous>, transform_indices = @transform_3, window_bounds = array<i64: 128, 128>}, {pipeline_mode = #tpu.pipeline_mode<synchronous>, transform_indices = @transform_4, window_bounds = array<i64: 1, 128>}, {pipeline_mode = #tpu.pipeline_mode<synchronous>, transform_indices = @transform_5, window_bounds = array<i64: 128, 128>}, {pipeline_mode = #tpu.pipeline_mode<synchronous>, transform_indices = @transform_6, window_bounds = array<i64: 1, 128>}, {transform_indices = @transform_7, window_bounds = array<i64: 16, 128>}]} {
    %c0 = arith.constant 0 : index
    %c0_0 = arith.constant 0 : index
    %0 = vector.load %arg1[%c0, %c0_0] : memref<16x128xbf16, #tpu.memory_space<vmem>>, vector<16x128xbf16>
    %c0_1 = arith.constant 0 : index
    %c0_2 = arith.constant 0 : index
    %1 = vector.load %arg2[%c0_1, %c0_2] : memref<128x128xbf16, #tpu.memory_space<vmem>>, vector<128x128xbf16>
    %c0_3 = arith.constant 0 : index
    %c0_4 = arith.constant 0 : index
    %2 = vector.load %arg3[%c0_3, %c0_4] : memref<1x128xf32, #tpu.memory_space<vmem>>, vector<1x128xf32>
    %cst = arith.constant dense<0.000000e+00> : vector<16x128xf32>
    %3 = tpu.matmul %0, %1, %cst {dimension_numbers = #tpu.dot_dimension_numbers<[1], [0], [0], [1], [0, 0, 1, 1], [], []>} : vector<16x128xbf16>, vector<128x128xbf16>, vector<16x128xf32> -> vector<16x128xf32>
    %4 = vector.broadcast %2 : vector<1x128xf32> to vector<16x128xf32>
    %5 = arith.addf %3, %4 : vector<16x128xf32>
    %cst_5 = arith.constant 0.000000e+00 : f32
    %6 = vector.broadcast %cst_5 : f32 to vector<16x128xf32>
    %7 = arith.maximumf %5, %6 : vector<16x128xf32>
    %c0_6 = arith.constant 0 : index
    %c0_7 = arith.constant 0 : index
    %8 = vector.load %arg4[%c0_6, %c0_7] : memref<128x128xbf16, #tpu.memory_space<vmem>>, vector<128x128xbf16>
    %c0_8 = arith.constant 0 : index
    %c0_9 = arith.constant 0 : index
    %9 = vector.load %arg5[%c0_8, %c0_9] : memref<1x128xf32, #tpu.memory_space<vmem>>, vector<1x128xf32>
    %10 = arith.truncf %7 : vector<16x128xf32> to vector<16x128xbf16>
    %cst_10 = arith.constant dense<0.000000e+00> : vector<16x128xf32>
    %11 = tpu.matmul %10, %8, %cst_10 {dimension_numbers = #tpu.dot_dimension_numbers<[1], [0], [0], [1], [0, 0, 1, 1], [], []>} : vector<16x128xbf16>, vector<128x128xbf16>, vector<16x128xf32> -> vector<16x128xf32>
    %12 = vector.broadcast %9 : vector<1x128xf32> to vector<16x128xf32>
    %13 = arith.addf %11, %12 : vector<16x128xf32>
    %cst_11 = arith.constant 0.000000e+00 : f32
    %14 = vector.broadcast %cst_11 : f32 to vector<16x128xf32>
    %15 = arith.maximumf %13, %14 : vector<16x128xf32>
    %c0_12 = arith.constant 0 : index
    %c0_13 = arith.constant 0 : index
    %16 = vector.load %arg6[%c0_12, %c0_13] : memref<128x128xbf16, #tpu.memory_space<vmem>>, vector<128x128xbf16>
    %c0_14 = arith.constant 0 : index
    %c0_15 = arith.constant 0 : index
    %17 = vector.load %arg7[%c0_14, %c0_15] : memref<1x128xf32, #tpu.memory_space<vmem>>, vector<1x128xf32>
    %18 = arith.truncf %15 : vector<16x128xf32> to vector<16x128xbf16>
    %cst_16 = arith.constant dense<0.000000e+00> : vector<16x128xf32>
    %19 = tpu.matmul %18, %16, %cst_16 {dimension_numbers = #tpu.dot_dimension_numbers<[1], [0], [0], [1], [0, 0, 1, 1], [], []>} : vector<16x128xbf16>, vector<128x128xbf16>, vector<16x128xf32> -> vector<16x128xf32>
    %20 = vector.broadcast %17 : vector<1x128xf32> to vector<16x128xf32>
    %21 = arith.addf %19, %20 : vector<16x128xf32>
    %c0_17 = arith.constant 0 : index
    %c0_18 = arith.constant 0 : index
    %22 = vector.load %arg8[%c0_17, %c0_18] : memref<16x128xf32, #tpu.memory_space<vmem>>, vector<16x128xf32>
    tpu.vector_store %arg8[%c0_17, %c0_18], %21 {strides = array<i32>} : memref<16x128xf32, #tpu.memory_space<vmem>>, vector<16x128xf32>,
    return
  }
  func.func @transform_0(%arg0: i32) -> (i32, i32) {
    %c0_i32 = arith.constant 0 : i32
    %c0_i32_0 = arith.constant 0 : i32
    return %arg0, %c0_i32 : i32, i32
  }
  func.func @transform_1(%arg0: i32) -> (i32, i32) {
    %c0_i32 = arith.constant 0 : i32
    %c0_i32_0 = arith.constant 0 : i32
    %c0_i32_1 = arith.constant 0 : i32
    return %c0_i32, %c0_i32_0 : i32, i32
  }
  func.func @transform_2(%arg0: i32) -> (i32, i32) {
    %c0_i32 = arith.constant 0 : i32
    %c0_i32_0 = arith.constant 0 : i32
    %c0_i32_1 = arith.constant 0 : i32
    return %c0_i32, %c0_i32_0 : i32, i32
  }
  func.func @transform_3(%arg0: i32) -> (i32, i32) {
    %c0_i32 = arith.constant 0 : i32
    %c0_i32_0 = arith.constant 0 : i32
    %c0_i32_1 = arith.constant 0 : i32
    return %c0_i32, %c0_i32_0 : i32, i32
  }
  func.func @transform_4(%arg0: i32) -> (i32, i32) {
    %c0_i32 = arith.constant 0 : i32
    %c0_i32_0 = arith.constant 0 : i32
    %c0_i32_1 = arith.constant 0 : i32
    return %c0_i32, %c0_i32_0 : i32, i32
  }
  func.func @transform_5(%arg0: i32) -> (i32, i32) {
    %c0_i32 = arith.constant 0 : i32
    %c0_i32_0 = arith.constant 0 : i32
    %c0_i32_1 = arith.constant 0 : i32
    return %c0_i32, %c0_i32_0 : i32, i32
  }
  func.func @transform_6(%arg0: i32) -> (i32, i32) {
    %c0_i32 = arith.constant 0 : i32
    %c0_i32_0 = arith.constant 0 : i32
    %c0_i32_1 = arith.constant 0 : i32
    return %c0_i32, %c0_i32_0 : i32, i32
  }
  func.func @transform_7(%arg0: i32) -> (i32, i32) {
    %c0_i32 = arith.constant 0 : i32
    %c0_i32_0 = arith.constant 0 : i32
    return %arg0, %c0_i32 : i32, i32
  }
}

</mosaic_0001>

<llo_original>
// kernel: _lambda_.1
$region0: #{_lambda_.1}
  #allocation0 [shape = 'u32[]', space=smem, size = 0x4, offset = 0x4, fixed_abs, tag = 'smem constant byte address 0x4 - core index']
  #allocation1 [shape = 'u32[144,128]{1,0:T(1,128)}', space=vmem, size = 0x12000, scoped, tag = 'internal scratch']
  %s0 = inlined_call_operand.vmem [shape: bf16[16,128], index: 0, kind: input, shape index: {}]
  %s1 = inlined_call_operand.hbm [shape: bf16[128,128], index: 1, kind: input, shape index: {}]
  %s2 = inlined_call_operand.vmem [shape: f32[1,128], index: 2, kind: input, shape index: {}]
  %s3 = inlined_call_operand.hbm [shape: bf16[128,128], index: 3, kind: input, shape index: {}]
  %s4 = inlined_call_operand.vmem [shape: f32[1,128], index: 4, kind: input, shape index: {}]
  %s5 = inlined_call_operand.hbm [shape: bf16[128,128], index: 5, kind: input, shape index: {}]
  %s6 = inlined_call_operand.vmem [shape: f32[1,128], index: 6, kind: input, shape index: {}]
  %s7 = inlined_call_operand.vmem [shape: f32[16,128], index: 7, kind: output, shape index: {}]
  %s8 = sld [smem:[#allocation0]]
  $region50: #{_lambda_.1} parent=0
    _
  %s10 = ssub.s32 1, %s8
  %s11 = scalar_select 0, %s10, %s8
  $region1: #{_lambda_.1} parent=0
    #allocation2 [shape = 'u8[32768]{0}', space=vmem, size = 0x8000, scoped, tag = 'input window, operand 1, single buffered']
    #allocation3 [shape = 's32[1]{0}', space=sflag, size = 0x4, scoped, tag = 'scoped memory for _lambda_.1']
    #allocation4 [shape = 'u8[32768]{0}', space=vmem, size = 0x8000, scoped, tag = 'input window, operand 3, single buffered']
    #allocation5 [shape = 's32[1]{0}', space=sflag, size = 0x4, scoped, tag = 'scoped memory for _lambda_.1']
    #allocation6 [shape = 'u8[32768]{0}', space=vmem, size = 0x8000, scoped, tag = 'input window, operand 5, single buffered']
    %12 = vsyncpa [#allocation3], 0
    %13 = vsyncpa [#allocation5], 0
    // Predicated region
    $region2: #{_lambda_.1} parent=1 // pred_check
      _
    $region3: #{_lambda_.1} parent=1 // pred_check_branch
      %15 = sbr.rel (0) target = $region5
    $region4: #{_lambda_.1} parent=1 // pred_region
      _
    $region5: #{_lambda_.1} parent=1 // pred_fallthru
      _
    // Predicated region
    $region6: #{_lambda_.1} parent=1 // pred_check
      _
    $region7: #{_lambda_.1} parent=1 // pred_check_branch
      %17 = sbr.rel (0) target = $region9
    $region8: #{_lambda_.1} parent=1 // pred_region
      %s19 = ssub.s32 1024, 1024
      %20 = vsyncadd [#allocation3], %s19
      %s21 = sshll.u32 [#allocation2], 4
      %s22 = int_to_ptr.vmem [resolvable:$true] %s21
      %27 = dma.hbm_to_vmem [thread:$0]  %s1, 1024, %s22, [#allocation3], 64, 64, 4
    $region9: #{_lambda_.1} parent=1 // pred_fallthru
      _
    // Predicated region
    $region10: #{_lambda_.1} parent=1 // pred_check
      _
    $region11: #{_lambda_.1} parent=1 // pred_check_branch
      %29 = sbr.rel (0) target = $region13
    $region12: #{_lambda_.1} parent=1 // pred_region
      _
    $region13: #{_lambda_.1} parent=1 // pred_fallthru
      _
    // Predicated region
    $region14: #{_lambda_.1} parent=1 // pred_check
      _
    $region15: #{_lambda_.1} parent=1 // pred_check_branch
      %31 = sbr.rel (0) target = $region17
    $region16: #{_lambda_.1} parent=1 // pred_region
      %s33 = ssub.s32 1024, 1024
      %34 = vsyncadd [#allocation5], %s33
      %s35 = sshll.u32 [#allocation4], 4
      %s36 = int_to_ptr.vmem [resolvable:$true] %s35
      %41 = dma.hbm_to_vmem [thread:$0]  %s3, 1024, %s36, [#allocation5], 64, 64, 4
    $region17: #{_lambda_.1} parent=1 // pred_fallthru
      _
    // Predicated region
    $region18: #{_lambda_.1} parent=1 // pred_check
      _
    $region19: #{_lambda_.1} parent=1 // pred_check_branch
      %43 = sbr.rel (0) target = $region21
    $region20: #{_lambda_.1} parent=1 // pred_region
      _
    $region21: #{_lambda_.1} parent=1 // pred_fallthru
      _
    // Predicated region
    $region22: #{_lambda_.1} parent=1 // pred_check
      _
    $region23: #{_lambda_.1} parent=1 // pred_check_branch
      %45 = sbr.rel (0) target = $region25
    $region24: #{_lambda_.1} parent=1 // pred_region
      %s47 = ssub.s32 1024, 1024
      %48 = vsyncadd [#allocation5], %s47
      %s49 = sshll.u32 [#allocation6], 4
      %s50 = int_to_ptr.vmem [resolvable:$true] %s49
      %55 = dma.hbm_to_vmem [thread:$0]  %s5, 1024, %s50, [#allocation5], 64, 64, 4
    $region25: #{_lambda_.1} parent=1 // pred_fallthru
      _
    // Predicated region
    $region26: #{_lambda_.1} parent=1 // pred_check
      _
    $region27: #{_lambda_.1} parent=1 // pred_check_branch
      %57 = sbr.rel (0) target = $region29
    $region28: #{_lambda_.1} parent=1 // pred_region
      _
    $region29: #{_lambda_.1} parent=1 // pred_fallthru
      _
    // Predicated region
    $region30: #{_lambda_.1} parent=1 // pred_check
      _
    $region31: #{_lambda_.1} parent=1 // pred_check_branch
      %59 = sbr.rel (0) target = $region33
    $region32: #{_lambda_.1} parent=1 // pred_region
      %60 = dma.done [#allocation3], 1024
    $region33: #{_lambda_.1} parent=1 // pred_fallthru
      _
    // Predicated region
    $region34: #{_lambda_.1} parent=1 // pred_check
      _
    $region35: #{_lambda_.1} parent=1 // pred_check_branch
      %62 = sbr.rel (0) target = $region37
    $region36: #{_lambda_.1} parent=1 // pred_region
      %63 = dma.done [#allocation5], 1024
    $region37: #{_lambda_.1} parent=1 // pred_fallthru
      _
    // Predicated region
    $region38: #{_lambda_.1} parent=1 // pred_check
      _
    $region39: #{_lambda_.1} parent=1 // pred_check_branch
      %65 = sbr.rel (0) target = $region41
    $region40: #{_lambda_.1} parent=1 // pred_region
      %66 = dma.done [#allocation5], 1024
    $region41: #{_lambda_.1} parent=1 // pred_fallthru
      _
    %v68 = vld [vmem:[%s0] sm:$0xf]
    %v69 = vld [vmem:[%s0 + $0x4] sm:$0xf]
    %v70 = vld [vmem:[#allocation2] sm:$0xf]
    %v71 = vld [vmem:[#allocation2 + $0x4] sm:$0xf]
    %v72 = vld [vmem:[#allocation2 + $0x8] sm:$0xf]
    %v73 = vld [vmem:[#allocation2 + $0xc] sm:$0xf]
    %v74 = vld [vmem:[#allocation2 + $0x10] sm:$0xf]
    %v75 = vld [vmem:[#allocation2 + $0x14] sm:$0xf]
    %v76 = vld [vmem:[#allocation2 + $0x18] sm:$0xf]
    %v77 = vld [vmem:[#allocation2 + $0x1c] sm:$0xf]
    %v78 = vld [vmem:[#allocation2 + $0x20] sm:$0xf]
    %v79 = vld [vmem:[#allocation2 + $0x24] sm:$0xf]
    %v80 = vld [vmem:[#allocation2 + $0x28] sm:$0xf]
    %v81 = vld [vmem:[#allocation2 + $0x2c] sm:$0xf]
    %v82 = vld [vmem:[#allocation2 + $0x30] sm:$0xf]
    %v83 = vld [vmem:[#allocation2 + $0x34] sm:$0xf]
    %v84 = vld [vmem:[#allocation2 + $0x38] sm:$0xf]
    %v85 = vld [vmem:[#allocation2 + $0x3c] sm:$0xf]
    %v86 = vld [vmem:[%s2] sm:$0x1]
    %v88 = vlaneseq
    %v89 = vshrl.u32 %v88, 7
    %v90 = vsub.s32 0, %v89
    %v91 = vrot.slane %v86, %v90
    %v95 = vunpack.c.l.b16 %v68
    %v96 = vunpack.c.l.b16 %v69
    %v97 = vpack.c.b16 %v96, %v95
    %v115 = vunpack.c.l.b16 %v70
    %v116 = vunpack.c.l.b16 %v71
    %v117 = vunpack.c.l.b16 %v72
    %v118 = vunpack.c.l.b16 %v73
    %v119 = vunpack.c.l.b16 %v74
    %v120 = vunpack.c.l.b16 %v75
    %v121 = vunpack.c.l.b16 %v76
    %v122 = vunpack.c.l.b16 %v77
    %v123 = vunpack.c.l.b16 %v78
    %v124 = vunpack.c.l.b16 %v79
    %v125 = vunpack.c.l.b16 %v80
    %v126 = vunpack.c.l.b16 %v81
    %v127 = vunpack.c.l.b16 %v82
    %v128 = vunpack.c.l.b16 %v83
    %v129 = vunpack.c.l.b16 %v84
    %v130 = vunpack.c.l.b16 %v85
    %v131 = vpack.c.b16 %v116, %v115
    %v132 = vpack.c.b16 %v118, %v117
    %v133 = vpack.c.b16 %v120, %v119
    %v134 = vpack.c.b16 %v122, %v121
    %v135 = vpack.c.b16 %v124, %v123
    %v136 = vpack.c.b16 %v126, %v125
    %v137 = vpack.c.b16 %v128, %v127
    %v138 = vpack.c.b16 %v130, %v129
    %147 = vmatprep.subr.bf16.mxu0 0
    %148 = vmatpush1.bf16.msra.mxu0 %v131
    %149 = vmatprep.subr.bf16.mxu0 0
    %150 = vmatpush1.bf16.msra.mxu0 %v132
    %151 = vmatprep.subr.bf16.mxu0 0
    %152 = vmatpush1.bf16.msra.mxu0 %v133
    %153 = vmatprep.subr.bf16.mxu0 0
    %154 = vmatpush1.bf16.msra.mxu0 %v134
    %155 = vmatprep.subr.bf16.mxu0 0
    %156 = vmatpush1.bf16.msra.mxu0 %v135
    %157 = vmatprep.subr.bf16.mxu0 0
    %158 = vmatpush1.bf16.msra.mxu0 %v136
    %159 = vmatprep.subr.bf16.mxu0 0
    %160 = vmatpush1.bf16.msra.mxu0 %v137
    %161 = vmatprep.subr.bf16.mxu0 0
    %162 = vmatpush1.bf16.msra.mxu0 %v138
    %163 = vmatprep.subr.bf16.mxu0 0
    %164 = vmatpush1.bf16.msra.mxu0 0
    %165 = vmatprep.subr.bf16.mxu0 0
    %166 = vmatpush1.bf16.msra.mxu0 0
    %167 = vmatprep.subr.bf16.mxu0 0
    %168 = vmatpush1.bf16.msra.mxu0 0
    %169 = vmatprep.subr.bf16.mxu0 0
    %170 = vmatpush1.bf16.msra.mxu0 0
    %171 = vmatprep.subr.bf16.mxu0 0
    %172 = vmatpush1.bf16.msra.mxu0 0
    %173 = vmatprep.subr.bf16.mxu0 0
    %174 = vmatpush1.bf16.msra.mxu0 0
    %175 = vmatprep.subr.bf16.mxu0 0
    %176 = vmatpush1.bf16.msra.mxu0 0
    %177 = vmatprep.subr.bf16.mxu0 0
    %178 = vmatpush1.bf16.msra.mxu0 0
    %179 = vmatprep.mubr.bf16.mxu0 0
    %180 = vmatmul.mubr.bf16.gmra.mrb[0].mxu0 %v97
    %v181 = vpop.f32.mrb[0].mxu0
    %v182 = vadd.f32 %v91, %v181
    %v183 = vpop.f32.mrb[0].mxu0
    %v184 = vpop.f32.mrb[0].mxu0
    %v185 = vadd.f32 %v91, %v184
    %v186 = vpop.f32.mrb[0].mxu0
    %187 = vdwg.mxu0
    %v188 = vmax.f32 %v182, 0.0
    %v189 = vmax.f32 %v185, 0.0
    %v190 = vld [vmem:[#allocation4] sm:$0xf]
    %v191 = vld [vmem:[#allocation4 + $0x4] sm:$0xf]
    %v192 = vld [vmem:[#allocation4 + $0x8] sm:$0xf]
    %v193 = vld [vmem:[#allocation4 + $0xc] sm:$0xf]
    %v194 = vld [vmem:[#allocation4 + $0x10] sm:$0xf]
    %v195 = vld [vmem:[#allocation4 + $0x14] sm:$0xf]
    %v196 = vld [vmem:[#allocation4 + $0x18] sm:$0xf]
    %v197 = vld [vmem:[#allocation4 + $0x1c] sm:$0xf]
    %v198 = vld [vmem:[#allocation4 + $0x20] sm:$0xf]
    %v199 = vld [vmem:[#allocation4 + $0x24] sm:$0xf]
    %v200 = vld [vmem:[#allocation4 + $0x28] sm:$0xf]
    %v201 = vld [vmem:[#allocation4 + $0x2c] sm:$0xf]
    %v202 = vld [vmem:[#allocation4 + $0x30] sm:$0xf]
    %v203 = vld [vmem:[#allocation4 + $0x34] sm:$0xf]
    %v204 = vld [vmem:[#allocation4 + $0x38] sm:$0xf]
    %v205 = vld [vmem:[#allocation4 + $0x3c] sm:$0xf]
    %v206 = vld [vmem:[%s4] sm:$0x1]
    %v207 = vpack.c.bf16 %v189, %v188
    %v209 = vlaneseq
    %v210 = vshrl.u32 %v209, 7
    %v211 = vsub.s32 0, %v210
    %v212 = vrot.slane %v206, %v211
    %v230 = vunpack.c.l.b16 %v190
    %v231 = vunpack.c.l.b16 %v191
    %v232 = vunpack.c.l.b16 %v192
    %v233 = vunpack.c.l.b16 %v193
    %v234 = vunpack.c.l.b16 %v194
    %v235 = vunpack.c.l.b16 %v195
    %v236 = vunpack.c.l.b16 %v196
    %v237 = vunpack.c.l.b16 %v197
    %v238 = vunpack.c.l.b16 %v198
    %v239 = vunpack.c.l.b16 %v199
    %v240 = vunpack.c.l.b16 %v200
    %v241 = vunpack.c.l.b16 %v201
    %v242 = vunpack.c.l.b16 %v202
    %v243 = vunpack.c.l.b16 %v203
    %v244 = vunpack.c.l.b16 %v204
    %v245 = vunpack.c.l.b16 %v205
    %v246 = vpack.c.b16 %v231, %v230
    %v247 = vpack.c.b16 %v233, %v232
    %v248 = vpack.c.b16 %v235, %v234
    %v249 = vpack.c.b16 %v237, %v236
    %v250 = vpack.c.b16 %v239, %v238
    %v251 = vpack.c.b16 %v241, %v240
    %v252 = vpack.c.b16 %v243, %v242
    %v253 = vpack.c.b16 %v245, %v244
    %262 = vmatprep.subr.bf16.mxu0 0
    %263 = vmatpush1.bf16.msra.mxu0 %v246
    %264 = vmatprep.subr.bf16.mxu0 0
    %265 = vmatpush1.bf16.msra.mxu0 %v247
    %266 = vmatprep.subr.bf16.mxu0 0
    %267 = vmatpush1.bf16.msra.mxu0 %v248
    %268 = vmatprep.subr.bf16.mxu0 0
    %269 = vmatpush1.bf16.msra.mxu0 %v249
    %270 = vmatprep.subr.bf16.mxu0 0
    %271 = vmatpush1.bf16.msra.mxu0 %v250
    %272 = vmatprep.subr.bf16.mxu0 0
    %273 = vmatpush1.bf16.msra.mxu0 %v251
    %274 = vmatprep.subr.bf16.mxu0 0
    %275 = vmatpush1.bf16.msra.mxu0 %v252
    %276 = vmatprep.subr.bf16.mxu0 0
    %277 = vmatpush1.bf16.msra.mxu0 %v253
    %278 = vmatprep.subr.bf16.mxu0 0
    %279 = vmatpush1.bf16.msra.mxu0 0
    %280 = vmatprep.subr.bf16.mxu0 0
    %281 = vmatpush1.bf16.msra.mxu0 0
    %282 = vmatprep.subr.bf16.mxu0 0
    %283 = vmatpush1.bf16.msra.mxu0 0
    %284 = vmatprep.subr.bf16.mxu0 0
    %285 = vmatpush1.bf16.msra.mxu0 0
    %286 = vmatprep.subr.bf16.mxu0 0
    %287 = vmatpush1.bf16.msra.mxu0 0
    %288 = vmatprep.subr.bf16.mxu0 0
    %289 = vmatpush1.bf16.msra.mxu0 0
    %290 = vmatprep.subr.bf16.mxu0 0
    %291 = vmatpush1.bf16.msra.mxu0 0
    %292 = vmatprep.subr.bf16.mxu0 0
    %293 = vmatpush1.bf16.msra.mxu0 0
    %294 = vmatprep.mubr.bf16.mxu0 0
    %295 = vmatmul.mubr.bf16.gmra.mrb[0].mxu0 %v207
    %v296 = vpop.f32.mrb[0].mxu0
    %v297 = vadd.f32 %v212, %v296
    %v298 = vpop.f32.mrb[0].mxu0
    %v299 = vpop.f32.mrb[0].mxu0
    %v300 = vadd.f32 %v212, %v299
    %v301 = vpop.f32.mrb[0].mxu0
    %302 = vdwg.mxu0
    %v303 = vmax.f32 %v297, 0.0
    %v304 = vmax.f32 %v300, 0.0
    %v305 = vld [vmem:[#allocation6] sm:$0xf]
    %v306 = vld [vmem:[#allocation6 + $0x4] sm:$0xf]
    %v307 = vld [vmem:[#allocation6 + $0x8] sm:$0xf]
    %v308 = vld [vmem:[#allocation6 + $0xc] sm:$0xf]
    %v309 = vld [vmem:[#allocation6 + $0x10] sm:$0xf]
    %v310 = vld [vmem:[#allocation6 + $0x14] sm:$0xf]
    %v311 = vld [vmem:[#allocation6 + $0x18] sm:$0xf]
    %v312 = vld [vmem:[#allocation6 + $0x1c] sm:$0xf]
    %v313 = vld [vmem:[#allocation6 + $0x20] sm:$0xf]
    %v314 = vld [vmem:[#allocation6 + $0x24] sm:$0xf]
    %v315 = vld [vmem:[#allocation6 + $0x28] sm:$0xf]
    %v316 = vld [vmem:[#allocation6 + $0x2c] sm:$0xf]
    %v317 = vld [vmem:[#allocation6 + $0x30] sm:$0xf]
    %v318 = vld [vmem:[#allocation6 + $0x34] sm:$0xf]
    %v319 = vld [vmem:[#allocation6 + $0x38] sm:$0xf]
    %v320 = vld [vmem:[#allocation6 + $0x3c] sm:$0xf]
    %v321 = vld [vmem:[%s6] sm:$0x1]
    %v322 = vpack.c.bf16 %v304, %v303
    %v324 = vlaneseq
    %v325 = vshrl.u32 %v324, 7
    %v326 = vsub.s32 0, %v325
    %v327 = vrot.slane %v321, %v326
    %v345 = vunpack.c.l.b16 %v305
    %v346 = vunpack.c.l.b16 %v306
    %v347 = vunpack.c.l.b16 %v307
    %v348 = vunpack.c.l.b16 %v308
    %v349 = vunpack.c.l.b16 %v309
    %v350 = vunpack.c.l.b16 %v310
    %v351 = vunpack.c.l.b16 %v311
    %v352 = vunpack.c.l.b16 %v312
    %v353 = vunpack.c.l.b16 %v313
    %v354 = vunpack.c.l.b16 %v314
    %v355 = vunpack.c.l.b16 %v315
    %v356 = vunpack.c.l.b16 %v316
    %v357 = vunpack.c.l.b16 %v317
    %v358 = vunpack.c.l.b16 %v318
    %v359 = vunpack.c.l.b16 %v319
    %v360 = vunpack.c.l.b16 %v320
    %v361 = vpack.c.b16 %v346, %v345
    %v362 = vpack.c.b16 %v348, %v347
    %v363 = vpack.c.b16 %v350, %v349
    %v364 = vpack.c.b16 %v352, %v351
    %v365 = vpack.c.b16 %v354, %v353
    %v366 = vpack.c.b16 %v356, %v355
    %v367 = vpack.c.b16 %v358, %v357
    %v368 = vpack.c.b16 %v360, %v359
    %377 = vmatprep.subr.bf16.mxu0 0
    %378 = vmatpush1.bf16.msra.mxu0 %v361
    %379 = vmatprep.subr.bf16.mxu0 0
    %380 = vmatpush1.bf16.msra.mxu0 %v362
    %381 = vmatprep.subr.bf16.mxu0 0
    %382 = vmatpush1.bf16.msra.mxu0 %v363
    %383 = vmatprep.subr.bf16.mxu0 0
    %384 = vmatpush1.bf16.msra.mxu0 %v364
    %385 = vmatprep.subr.bf16.mxu0 0
    %386 = vmatpush1.bf16.msra.mxu0 %v365
    %387 = vmatprep.subr.bf16.mxu0 0
    %388 = vmatpush1.bf16.msra.mxu0 %v366
    %389 = vmatprep.subr.bf16.mxu0 0
    %390 = vmatpush1.bf16.msra.mxu0 %v367
    %391 = vmatprep.subr.bf16.mxu0 0
    %392 = vmatpush1.bf16.msra.mxu0 %v368
    %393 = vmatprep.subr.bf16.mxu0 0
    %394 = vmatpush1.bf16.msra.mxu0 0
    %395 = vmatprep.subr.bf16.mxu0 0
    %396 = vmatpush1.bf16.msra.mxu0 0
    %397 = vmatprep.subr.bf16.mxu0 0
    %398 = vmatpush1.bf16.msra.mxu0 0
    %399 = vmatprep.subr.bf16.mxu0 0
    %400 = vmatpush1.bf16.msra.mxu0 0
    %401 = vmatprep.subr.bf16.mxu0 0
    %402 = vmatpush1.bf16.msra.mxu0 0
    %403 = vmatprep.subr.bf16.mxu0 0
    %404 = vmatpush1.bf16.msra.mxu0 0
    %405 = vmatprep.subr.bf16.mxu0 0
    %406 = vmatpush1.bf16.msra.mxu0 0
    %407 = vmatprep.subr.bf16.mxu0 0
    %408 = vmatpush1.bf16.msra.mxu0 0
    %409 = vmatprep.mubr.bf16.mxu0 0
    %410 = vmatmul.mubr.bf16.gmra.mrb[0].mxu0 %v322
    %v411 = vpop.f32.mrb[0].mxu0
    %v412 = vadd.f32 %v327, %v411
    %v413 = vpop.f32.mrb[0].mxu0
    %v414 = vpop.f32.mrb[0].mxu0
    %v415 = vadd.f32 %v327, %v414
    %v416 = vpop.f32.mrb[0].mxu0
    %417 = vdwg.mxu0
    %418 = vst [vmem:[%s7] sm:$0xff] %v412
    %419 = vst [vmem:[%s7 + $0x8] sm:$0xff] %v415
    // Predicated region
    $region42: #{_lambda_.1} parent=1 // pred_check
      _
    $region43: #{_lambda_.1} parent=1 // pred_check_branch
      %421 = sbr.rel (0) target = $region45
    $region44: #{_lambda_.1} parent=1 // pred_region
      _
    $region45: #{_lambda_.1} parent=1 // pred_fallthru
      _
    // Predicated region
    $region46: #{_lambda_.1} parent=1 // pred_check
      _
    $region47: #{_lambda_.1} parent=1 // pred_check_branch
      %423 = sbr.rel (0) target = $region49
    $region48: #{_lambda_.1} parent=1 // pred_region
      _
    $region49: #{_lambda_.1} parent=1 // pred_fallthru
      _
    %424 = vsyncpa [#allocation3], 1
    %425 = vsyncpa [#allocation5], 1

</llo_original>
